<compile_context>
chip_gen: v5e
topology: v5e:2x2
jax: 0.10.0
libtpu: 0.0.40
codegen_flags: <defaults>
</compile_context>

<pallas_src>
import functools
import math

import jax
import jax.numpy as jnp
from jax import lax
from jax.experimental import pallas as pl
from jax.experimental.pallas import tpu as pltpu


def _cosnorm_kernel(x_ref, w_ref, invw_ref, o_ref, *, scale):
    """Produce one (tm, tn) output tile."""
    x = x_ref[...]                                   # (tm, D)  input dtype
    w = w_ref[...]                                   # (tn, D)  input dtype

    # Per-row factor f = scale / (1 + ||x_i||), computed in f32 (VPU + EUP).
    xf = x.astype(jnp.float32)
    ssq = jnp.sum(xf * xf, axis=-1, keepdims=True)   # (tm, 1)
    f = scale / (1.0 + jnp.sqrt(ssq))                # (tm, 1)

    # NT contraction x @ w^T directly on the MXU -- no transposed copy of w
    # is materialized through the XLU, and no (tm, D)/(tn, D) "ex"/"ew"
    # temporaries are built.
    acc = lax.dot_general(x, w, (((1,), (1,)), ((), ())),
                          preferred_element_type=jnp.float32)   # (tm, tn)

    # Scale AFTER the matmul: O(tm*tn) elementwise work instead of
    # O(tm*D + tn*D).  invw_ref is (1, tn) and broadcasts over rows.
    o_ref[...] = (acc * f * invw_ref[...]).astype(o_ref.dtype)


def _round_up(a, b):
    return (a + b - 1) // b * b


def cosnorm_classifier(x, weight, scale=16.0, *, tm=None, tn=None):
    """x: (B, in_dims), weight: (out_dims, in_dims) -> (B, out_dims) float32."""
    B, D = x.shape
    C, Dw = weight.shape
    assert D == Dw

    # Hoisted per-class inverse weight norm (computed once, not per B-tile).
    # Zero weight rows map to 0 instead of inf/NaN.
    wf = weight.astype(jnp.float32)
    ssq_w = jnp.sum(wf * wf, axis=1)
    inv_w = jnp.where(ssq_w > 0, lax.rsqrt(ssq_w), 0.0).reshape(1, C)

    # Tile sizes: sublane-aligned batch tiles, lane-dense class tiles.
    if tm is None:
        tm = min(256, _round_up(B, 8))
    if tn is None:
        tn = C if C <= 128 else 256

    Bp = _round_up(B, tm)
    Cp = _round_up(C, tn)
    if Bp != B:
        x = jnp.pad(x, ((0, Bp - B), (0, 0)))
    if Cp != C:
        weight = jnp.pad(weight, ((0, Cp - C), (0, 0)))
        inv_w = jnp.pad(inv_w, ((0, 0), (0, Cp - C)))

    grid = (Bp // tm, Cp // tn)
    kernel = functools.partial(_cosnorm_kernel, scale=float(scale))

    # TODO(synk): for very large D (full-D blocks no longer fit VMEM,
    # especially on v7x's 64 MiB), add a trailing "arbitrary" K grid axis
    # with a (tm, tn) f32 VMEM accumulator and per-row partial sum-of-squares.
    out = pl.pallas_call(
        kernel,
        out_shape=jax.ShapeDtypeStruct((Bp, Cp), jnp.float32),
        grid_spec=pltpu.PrefetchScalarGridSpec(
            num_scalar_prefetch=0,
            grid=grid,
            in_specs=[
                pl.BlockSpec((tm, D), lambda i, j: (i, 0)),   # x batch tile
                pl.BlockSpec((tn, D), lambda i, j: (j, 0)),   # weight class tile
                pl.BlockSpec((1, tn), lambda i, j: (0, j)),   # 1/||w|| tile
            ],
            out_specs=pl.BlockSpec((tm, tn), lambda i, j: (i, j)),
        ),
        compiler_params=pltpu.CompilerParams(
            # Both grid axes are independent -> megacore sharding on v7x.
            dimension_semantics=("parallel", "parallel")),
    )(x, weight, inv_w)

    return out[:B, :C]


def cosnorm_reference(x, weight, scale=16.0):
    norm_x = jnp.linalg.norm(x, axis=1, keepdims=True)
    ex = norm_x / (1.0 + norm_x) * (x / norm_x)
    ew = weight / jnp.linalg.norm(weight, axis=1, keepdims=True)
    return (scale * ex) @ ew.T


if __name__ == "__main__":
    key = jax.random.PRNGKey(0)
    k1, k2, k3, k4 = jax.random.split(key, 4)

    # --- toy config matching the module defaults ---
    in_dims, out_dims, batch, scale = 32, 16, 8, 16.0
    stdv = 1.0 / math.sqrt(in_dims)           # mirrors reset_parameters()
    w_small = jax.random.uniform(k1, (out_dims, in_dims),
                                 minval=-stdv, maxval=stdv, dtype=jnp.float32)
    x_small = jax.random.normal(k2, (batch, in_dims), dtype=jnp.float32)

    out = jax.block_until_ready(cosnorm_classifier(x_small, w_small, scale))
    ref = cosnorm_reference(x_small, w_small, scale)
    assert out.shape == (batch, out_dims)
    assert jnp.allclose(out, ref, atol=1e-4, rtol=1e-4), "mismatch (small)"

    # --- larger, unaligned config to exercise the tiled / padded path ---
    B2, D2, C2 = 300, 128, 200
    x_big = jax.random.normal(k3, (B2, D2), dtype=jnp.float32)
    w_big = jax.random.normal(k4, (C2, D2), dtype=jnp.float32) * 0.05
    out2 = jax.block_until_ready(cosnorm_classifier(x_big, w_big, scale))
    ref2 = cosnorm_reference(x_big, w_big, scale)
    assert out2.shape == (B2, C2)
    assert jnp.allclose(out2, ref2, atol=1e-4, rtol=1e-4), "mismatch (big)"

    print("KERNEL_OK")
</pallas_src>

<mosaic_0001>
module attributes {stable_mosaic.version = 11 : i64} {
  func.func @_cosnorm_kernel(%arg0: i32, %arg1: i32, %arg2: memref<8x32xf32, #tpu.memory_space<vmem>>, %arg3: memref<16x32xf32, #tpu.memory_space<vmem>>, %arg4: memref<1x16xf32, #tpu.memory_space<vmem>>, %arg5: memref<8x16xf32, #tpu.memory_space<vmem>>) attributes {dimension_semantics = [#tpu.dimension_semantics<parallel>, #tpu.dimension_semantics<parallel>], iteration_bounds = array<i64: 1, 1>, scalar_prefetch = 0 : i64, scratch_operands = 0 : i64, tpu.core_type = #tpu.core_type<tc>, window_params = [{transform_indices = @transform_0, window_bounds = array<i64: 8, 32>}, {transform_indices = @transform_1, window_bounds = array<i64: 16, 32>}, {transform_indices = @transform_2, window_bounds = array<i64: 1, 16>}, {transform_indices = @transform_3, window_bounds = array<i64: 8, 16>}]} {
    %c0 = arith.constant 0 : index
    %c0_0 = arith.constant 0 : index
    %0 = vector.load %arg2[%c0, %c0_0] : memref<8x32xf32, #tpu.memory_space<vmem>>, vector<8x32xf32>
    %c0_1 = arith.constant 0 : index
    %c0_2 = arith.constant 0 : index
    %1 = vector.load %arg3[%c0_1, %c0_2] : memref<16x32xf32, #tpu.memory_space<vmem>>, vector<16x32xf32>
    %2 = arith.mulf %0, %0 : vector<8x32xf32>
    %cst = arith.constant dense<0.000000e+00> : vector<8xf32>
    %3 = vector.multi_reduction <add>, %2, %cst [1] : vector<8x32xf32> to vector<8xf32>
    %4 = vector.shape_cast %3 : vector<8xf32> to vector<8x1xf32>
    %5 = math.sqrt %4 : vector<8x1xf32>
    %cst_3 = arith.constant 1.000000e+00 : f32
    %6 = vector.broadcast %cst_3 : f32 to vector<8x1xf32>
    %7 = arith.addf %6, %5 : vector<8x1xf32>
    %cst_4 = arith.constant 1.600000e+01 : f32
    %8 = vector.broadcast %cst_4 : f32 to vector<8x1xf32>
    %9 = arith.divf %8, %7 : vector<8x1xf32>
    %cst_5 = arith.constant dense<0.000000e+00> : vector<8x16xf32>
    %10 = tpu.matmul %0, %1, %cst_5 {dimension_numbers = #tpu.dot_dimension_numbers<[1], [1], [0], [0], [0, 0, 1, 0], [], []>} : vector<8x32xf32>, vector<16x32xf32>, vector<8x16xf32> -> vector<8x16xf32>
    %11 = vector.broadcast %9 : vector<8x1xf32> to vector<8x16xf32>
    %12 = arith.mulf %10, %11 : vector<8x16xf32>
    %c0_6 = arith.constant 0 : index
    %c0_7 = arith.constant 0 : index
    %13 = vector.load %arg4[%c0_6, %c0_7] : memref<1x16xf32, #tpu.memory_space<vmem>>, vector<1x16xf32>
    %14 = vector.broadcast %13 : vector<1x16xf32> to vector<8x16xf32>
    %15 = arith.mulf %12, %14 : vector<8x16xf32>
    %c0_8 = arith.constant 0 : index
    %c0_9 = arith.constant 0 : index
    %16 = vector.load %arg5[%c0_8, %c0_9] : memref<8x16xf32, #tpu.memory_space<vmem>>, vector<8x16xf32>
    tpu.vector_store %arg5[%c0_8, %c0_9], %15 {strides = array<i32>} : memref<8x16xf32, #tpu.memory_space<vmem>>, vector<8x16xf32>,
    return
  }
  func.func @transform_0(%arg0: i32, %arg1: i32) -> (i32, i32) {
    %c0_i32 = arith.constant 0 : i32
    %c0_i32_0 = arith.constant 0 : i32
    return %arg0, %c0_i32 : i32, i32
  }
  func.func @transform_1(%arg0: i32, %arg1: i32) -> (i32, i32) {
    %c0_i32 = arith.constant 0 : i32
    %c0_i32_0 = arith.constant 0 : i32
    return %arg1, %c0_i32 : i32, i32
  }
  func.func @transform_2(%arg0: i32, %arg1: i32) -> (i32, i32) {
    %c0_i32 = arith.constant 0 : i32
    %c0_i32_0 = arith.constant 0 : i32
    return %c0_i32, %arg1 : i32, i32
  }
  func.func @transform_3(%arg0: i32, %arg1: i32) -> (i32, i32) {
    %c0_i32 = arith.constant 0 : i32
    return %arg0, %arg1 : i32, i32
  }
}

</mosaic_0001>

<llo_original>
// kernel: tpu_custom_call.1
$region0: #{tpu_custom_call.1}
  #allocation0 [shape = 'u32[]', space=smem, size = 0x4, offset = 0x4, fixed_abs, tag = 'smem constant byte address 0x4 - core index']
  #allocation1 [shape = 'u32[72,128]{1,0:T(1,128)}', space=vmem, size = 0x9000, scoped, tag = 'internal scratch']
  %s0 = inlined_call_operand.hbm [shape: f32[8,32], index: 0, kind: input, shape index: {}]
  %s1 = inlined_call_operand.hbm [shape: f32[16,32], index: 1, kind: input, shape index: {}]
  %s2 = inlined_call_operand.vmem [shape: f32[1,16], index: 2, kind: input, shape index: {}]
  %s3 = inlined_call_operand.hbm [shape: f32[8,16], index: 3, kind: output, shape index: {}]
  %s4 = sld [smem:[#allocation0]]
  $region30: #{tpu_custom_call.1} parent=0
    _
  %s6 = ssub.s32 1, %s4
  %s7 = scalar_select 0, %s6, %s4
  $region1: #{tpu_custom_call.1} parent=0
    #allocation2 [shape = 'u8[4096]{0}', space=vmem, size = 0x1000, scoped, tag = 'input window, operand 0, single buffered']
    #allocation3 [shape = 's32[1]{0}', space=sflag, size = 0x4, scoped, tag = 'scoped memory for tpu_custom_call.1']
    #allocation4 [shape = 's32[1]{0}', space=sflag, size = 0x4, scoped, tag = 'scoped memory for tpu_custom_call.1']
    #allocation5 [shape = 'u8[8192]{0}', space=vmem, size = 0x2000, scoped, tag = 'input window, operand 1, single buffered']
    #allocation6 [shape = 's32[1]{0}', space=sflag, size = 0x4, scoped, tag = 'scoped memory for tpu_custom_call.1']
    #allocation7 [shape = 'u8[4096]{0}', space=vmem, size = 0x1000, scoped, tag = 'output window, operand 0, single buffered']
    %8 = vsyncpa [#allocation3], 0
    %9 = vsyncpa [#allocation6], 0
    %10 = vsyncpa [#allocation4], 0
    // Predicated region
    $region2: #{tpu_custom_call.1} parent=1 // pred_check
      _
    $region3: #{tpu_custom_call.1} parent=1 // pred_check_branch
      %12 = sbr.rel (0) target = $region5
    $region4: #{tpu_custom_call.1} parent=1 // pred_region
      %14 = vsyncadd [#allocation3], 0
      %s16 = sshll.u32 %s0, 4
      %s17 = int_to_ptr.hbm [resolvable:$true] %s16
      %s18 = sshll.u32 [#allocation2], 4
      %s19 = int_to_ptr.vmem [resolvable:$true] %s18
      %21 = dma.hbm_to_vmem [thread:$0]  %s17, 128, %s19, [#allocation3]
    $region5: #{tpu_custom_call.1} parent=1 // pred_fallthru
      _
    // Predicated region
    $region6: #{tpu_custom_call.1} parent=1 // pred_check
      _
    $region7: #{tpu_custom_call.1} parent=1 // pred_check_branch
      %23 = sbr.rel (0) target = $region9
    $region8: #{tpu_custom_call.1} parent=1 // pred_region
      %25 = vsyncadd [#allocation6], 0
      %s26 = sshll.u32 %s1, 4
      %s27 = int_to_ptr.hbm [resolvable:$true] %s26
      %s28 = sshll.u32 [#allocation5], 4
      %s29 = int_to_ptr.vmem [resolvable:$true] %s28
      %34 = dma.hbm_to_vmem [thread:$0]  %s27, 256, %s29, [#allocation6], 128, 128, 8
    $region9: #{tpu_custom_call.1} parent=1 // pred_fallthru
      _
    // Predicated region
    $region10: #{tpu_custom_call.1} parent=1 // pred_check
      _
    $region11: #{tpu_custom_call.1} parent=1 // pred_check_branch
      %36 = sbr.rel (0) target = $region13
    $region12: #{tpu_custom_call.1} parent=1 // pred_region
      _
    $region13: #{tpu_custom_call.1} parent=1 // pred_fallthru
      _
    // Predicated region
    $region14: #{tpu_custom_call.1} parent=1 // pred_check
      _
    $region15: #{tpu_custom_call.1} parent=1 // pred_check_branch
      %38 = sbr.rel (0) target = $region17
    $region16: #{tpu_custom_call.1} parent=1 // pred_region
      %40 = dma.done [#allocation3], 128
    $region17: #{tpu_custom_call.1} parent=1 // pred_fallthru
      _
    // Predicated region
    $region18: #{tpu_custom_call.1} parent=1 // pred_check
      _
    $region19: #{tpu_custom_call.1} parent=1 // pred_check_branch
      %42 = sbr.rel (0) target = $region21
    $region20: #{tpu_custom_call.1} parent=1 // pred_region
      %44 = dma.done [#allocation6], 256
    $region21: #{tpu_custom_call.1} parent=1 // pred_fallthru
      _
    %v45 = vld [vmem:[#allocation2] sm:$0xff]
    %v46 = vld [vmem:[#allocation5] sm:$0xff]
    %v47 = vld [vmem:[#allocation5 + $0x8] sm:$0xff]
    %v48 = vmul.f32 %v45, %v45
    %vm49 = vcmask 261120
    %v50 = vsel %vm49, %v48, 0.0
    %51 = vadd.xlane.f32.xlu0 %v50
    %v52 = vpop.xlane.xlu0 %51
    %v53 = vrsqrt.pop %v52
    %v54 = vmul.f32 %v53, %v52
    %v55 = vmul.f32 %v54, %v53
    %v56 = vmul.f32 0.5, %v55
    %v57 = vsub.f32 1.5, %v56
    %v58 = vmul.f32 %v53, %v57
    %v59 = vmul.f32 %v52, %v58
    %vm60 = vcmp.eq.f32.partialorder %v52, inf
    %v61 = vsel %vm60, %v52, %v59
    %vm62 = vcmp.eq.f32.partialorder %v52, 0.0
    %v63 = vand.u32 %v52, 2147483648
    %v64 = vsel %vm62, %v63, %v61
    %v65 = vadd.f32 %v64, 1.0
    %v66 = vrcp.pop %v65
    %v67 = vmul.f32 %v65, %v66
    %v68 = vsub.f32 1.0, %v67
    %v69 = vmul.f32 %v66, %v68
    %v70 = vadd.f32 %v66, %v69
    %vm71 = vweird.f32 %v65
    %vm72 = vweird.f32 %v66
    %vm73 = vmor %vm71, %vm72
    %v74 = vsel %vm73, %v66, %v70
    %v75 = vand.u32 2147483647, %v65
    %vm76 = vcmp.eq.f32.partialorder %v75, 8.507059e+37
    %v77 = vand.u32 %v65, 2147483648
    %v78 = vor.u32 1.1754944e-38, %v77
    %v79 = vsel %vm76, %v78, %v74
    %v80 = vmul.f32 16.0, %v79
    %v82 = vsel %vm49, %v45, 0
    %v85 = vsel %vm49, %v46, 0
    %v88 = vsel %vm49, %v47, 0
    %90 = vmatpush.xpose.msra.mxu0 0.0
    %91 = vmatpush.xpose.msra.mxu0 0.0
    %92 = vmatpush.xpose.msra.mxu0 0.0
    %93 = vmatpush.xpose.msra.mxu0 0.0
    %94 = vmatpush.xpose.msra.mxu0 0.0
    %95 = vmatpush.xpose.msra.mxu0 0.0
    %96 = vmatpush.xpose.msra.mxu0 0.0
    %97 = vmatpush.xpose.msra.mxu0 0.0
    %98 = vmatpush.xpose.msra.mxu0 0.0
    %99 = vmatpush.xpose.msra.mxu0 0.0
    %100 = vmatpush.xpose.msra.mxu0 0.0
    %101 = vmatpush.xpose.msra.mxu0 0.0
    %102 = vmatpush.xpose.msra.mxu0 0.0
    %103 = vmatpush.xpose.msra.mxu0 0.0
    %104 = vmatpush.xpose.msra.mxu0 %v88
    %105 = vmatpush.xpose.msra.mxu0 %v85
    %106 = vmatmul.f32.gmra.mxu0 %v82
    %v107 = vpop.f32.mrf.mxu0
    %v108 = vadd.f32 0.0, %v107
    %109 = vdwg.mxu0
    %v110 = vmul.f32 %v108, %v80
    %v111 = vld [vmem:[%s2] sm:$0x1]
    %v113 = vperm.slane %v111, 0
    %v115 = vmul.f32 %v110, %v113
    %vm116 = vcmask 130048
    %117 = vst.msk [vmem:[#allocation7] sm:$0xff] %vm116, %v115
    // Predicated region
    $region22: #{tpu_custom_call.1} parent=1 // pred_check
      _
    $region23: #{tpu_custom_call.1} parent=1 // pred_check_branch
      %119 = sbr.rel (0) target = $region25
    $region24: #{tpu_custom_call.1} parent=1 // pred_region
      %121 = vsyncadd [#allocation4], 0
      %s123 = sshll.u32 [#allocation7], 4
      %s124 = int_to_ptr.vmem [resolvable:$true] %s123
      %s125 = sshll.u32 %s3, 4
      %s126 = int_to_ptr.hbm [resolvable:$true] %s125
      %128 = dma.vmem_to_hbm [thread:$0]  %s124, 128, %s126, [#allocation4]
    $region25: #{tpu_custom_call.1} parent=1 // pred_fallthru
      _
    // Predicated region
    $region26: #{tpu_custom_call.1} parent=1 // pred_check
      _
    $region27: #{tpu_custom_call.1} parent=1 // pred_check_branch
      %130 = sbr.rel (0) target = $region29
    $region28: #{tpu_custom_call.1} parent=1 // pred_region
      %132 = dma.done [#allocation4], 128
    $region29: #{tpu_custom_call.1} parent=1 // pred_fallthru
      _
    %133 = vsyncpa [#allocation3], 1
    %134 = vsyncpa [#allocation6], 1
    %135 = vsyncpa [#allocation4], 1

</llo_original>
